<compile_context>
chip_gen: v5e
topology: v5e:2x2
jax: 0.10.0
libtpu: 0.0.40
codegen_flags: <defaults>
</compile_context>

<pallas_src>
import functools

import jax
import jax.numpy as jnp
from jax import lax
from jax.experimental import pallas as pl
from jax.experimental.pallas import tpu as pltpu


def _round_up(x, m):
    return ((x + m - 1) // m) * m


def _pad2d(a, m0, m1):
    """Zero-pad a 2-D array so dims are multiples of (m0, m1).  No-op if aligned."""
    p0 = _round_up(a.shape[0], m0) - a.shape[0]
    p1 = _round_up(a.shape[1], m1) - a.shape[1]
    if p0 == 0 and p1 == 0:
        return a
    return jnp.pad(a, ((0, p0), (0, p1)))


def _vmem_capacity_bytes():
    try:
        return int(pltpu.get_tpu_info().vmem_capacity_bytes)
    except Exception:
        return 64 << 20  # conservative: v7x per-TensorCore VMEM


def _vmem_limit(footprint_bytes):
    cap = _vmem_capacity_bytes()
    budget = max(32 << 20, (cap * 3) // 4)
    return int(min(max(footprint_bytes + (8 << 20), 32 << 20), budget))


# ------------------ standard tiled matmul: y = x @ w.T (+ bias) ------------------
def _matmul_nt_kernel(x_ref, w_ref, *refs, has_bias, use_acc_scratch):
    if has_bias:
        b_ref = refs[0]
        refs = refs[1:]
    o_ref = refs[0]
    acc_ref = refs[1] if use_acc_scratch else o_ref  # f32 output: accumulate in place

    k = pl.program_id(2)

    @pl.when(k == 0)
    def _():
        acc_ref[...] = jnp.zeros_like(acc_ref)

    # x: (tm, tk), w: (tn, tk) -> contract last dims of both (MXU-native "NT"
    # form; no in-kernel transpose, no wrapper-side weight.T HBM pass).
    acc_ref[...] += lax.dot_general(
        x_ref[...], w_ref[...],
        dimension_numbers=(((1,), (1,)), ((), ())),
        preferred_element_type=jnp.float32,
    )

    if use_acc_scratch or has_bias:
        @pl.when(k == pl.num_programs(2) - 1)
        def _():
            if use_acc_scratch:
                acc = acc_ref[...]
                if has_bias:
                    acc = acc + b_ref[...]          # (1, tn) broadcasts over rows
                o_ref[...] = acc.astype(o_ref.dtype)
            else:
                o_ref[...] = o_ref[...] + b_ref[...].astype(o_ref.dtype)


def _matmul_nt(x2d, w_nk, bias=None, *, tm=256, tn=512, tk=1024):
    """y = x2d @ w_nk.T (+ bias).  x2d: (M, K), w_nk: (N, K), bias: (N,) or None."""
    M, K = x2d.shape
    N, Kw = w_nk.shape
    assert K == Kw, (x2d.shape, w_nk.shape)

    Mp8 = _round_up(M, 8)
    Np128 = _round_up(N, 128)
    Kp128 = _round_up(K, 128)

    small_m = Mp8 < 128
    if small_m:
        # Weight-streaming regime: tm is tiny anyway, so cut grid steps and
        # weight re-streams by growing tn/tk instead.
        tn, tk = 1024, 2048
        # Keep >= 2 N tiles so the "parallel" N axis can shard across v7x's 2 TCs.
        if Np128 >= 256:
            tn = min(tn, max(128, (Np128 // 2 // 128) * 128))

    tm = min(tm, Mp8)
    tn = min(tn, Np128)
    tk = min(tk, Kp128)

    xp = _pad2d(x2d, tm, tk)
    wp = _pad2d(w_nk, tn, tk)
    Mp, Kp = xp.shape
    Np = wp.shape[0]
    grid = (Mp // tm, Np // tn, Kp // tk)

    has_bias = bias is not None
    # f32 outputs accumulate directly into the resident output block; narrower
    # output dtypes keep a dedicated f32 scratch.
    use_acc_scratch = x2d.dtype != jnp.float32

    in_specs = [
        pl.BlockSpec((tm, tk), lambda i, j, k: (i, k)),   # x tile
        pl.BlockSpec((tn, tk), lambda i, j, k: (j, k)),   # weight tile, (N, K) layout
    ]
    operands = [xp, wp]
    if has_bias:
        bias2d = _pad2d(bias.reshape(1, N), 1, tn)
        in_specs.append(pl.BlockSpec((1, tn), lambda i, j, k: (0, j)))
        operands.append(bias2d)

    scratch_shapes = [pltpu.VMEM((tm, tn), jnp.float32)] if use_acc_scratch else []

    item = x2d.dtype.itemsize
    fp = 2 * (tm * tk + tn * tk) * item + 2 * tm * tn * item
    if has_bias:
        fp += 2 * tn * item
    if use_acc_scratch:
        fp += tm * tn * 4

    out = pl.pallas_call(
        functools.partial(_matmul_nt_kernel, has_bias=has_bias,
                          use_acc_scratch=use_acc_scratch),
        out_shape=jax.ShapeDtypeStruct((Mp, Np), x2d.dtype),
        grid_spec=pltpu.PrefetchScalarGridSpec(
            num_scalar_prefetch=0,
            grid=grid,
            in_specs=in_specs,
            out_specs=pl.BlockSpec((tm, tn), lambda i, j, k: (i, j)),
            scratch_shapes=scratch_shapes,
        ),
        compiler_params=pltpu.CompilerParams(
            dimension_semantics=("parallel", "parallel", "arbitrary"),
            vmem_limit_bytes=_vmem_limit(fp),
        ),
    )(*operands)

    if (Mp, Np) != (M, N):
        out = out[:M, :N]
    return out


# ------------- fused low-rank tail: y = (h @ core.T) @ vt.T (+ bias) -------------
def _lowrank_tail_kernel(h_ref, core_ref, vt_ref, *refs, has_bias):
    if has_bias:
        b_ref, o_ref, t_ref = refs
    else:
        o_ref, t_ref = refs

    # The (tm, r_out) intermediate depends only on the row block i: compute it
    # once per row block (at j == 0) and reuse for every N tile.  The N axis is
    # "arbitrary" so j == 0 is always visited first within each i block.
    @pl.when(pl.program_id(1) == 0)
    def _():
        t_ref[...] = lax.dot_general(
            h_ref[...], core_ref[...],
            dimension_numbers=(((1,), (1,)), ((), ())),
            preferred_element_type=jnp.float32,
        )

    # For f32 inputs the astype is a no-op (full f32 intermediate kept on-chip);
    # for narrow dtypes it matches the unfused reference behavior.
    y = lax.dot_general(
        t_ref[...].astype(vt_ref.dtype), vt_ref[...],
        dimension_numbers=(((1,), (1,)), ((), ())),
        preferred_element_type=jnp.float32,
    )
    if has_bias:
        y = y + b_ref[...]
    o_ref[...] = y.astype(o_ref.dtype)


def _tail_fused_footprint(M, N, r_in, r_out, itemsize, tm=512, tn=1024):
    tm = min(tm, _round_up(M, 8))
    tn = min(tn, _round_up(N, 128))
    r_in_p = _round_up(r_in, 128)
    r_out_p = _round_up(r_out, 128)
    fp = 2 * (tm * r_in_p + r_out_p * r_in_p + tn * r_out_p + tn) * itemsize
    fp += 2 * tm * tn * itemsize
    fp += tm * r_out_p * 4
    return fp


def _lowrank_tail_fused(h1, core, vt, bias, *, tm=512, tn=1024):
    """y = (h1 @ core.T) @ vt.T (+ bias); intermediate kept on-chip, computed once/row block."""
    M, r_in = h1.shape
    r_out = core.shape[0]
    N = vt.shape[0]

    tm = min(tm, _round_up(M, 8))
    tn = min(tn, _round_up(N, 128))

    hp = _pad2d(h1, tm, 128)
    cp = _pad2d(core, 128, 128)
    vp = _pad2d(vt, tn, 128)
    Mp, r_in_p = hp.shape
    r_out_p = cp.shape[0]
    Np = vp.shape[0]

    has_bias = bias is not None
    in_specs = [
        pl.BlockSpec((tm, r_in_p), lambda i, j: (i, 0)),        # h tile (constant over j)
        pl.BlockSpec((r_out_p, r_in_p), lambda i, j: (0, 0)),   # full core (resident)
        pl.BlockSpec((tn, r_out_p), lambda i, j: (j, 0)),       # VT tile
    ]
    operands = [hp, cp, vp]
    if has_bias:
        bp = _pad2d(bias.reshape(1, N), 1, tn)
        in_specs.append(pl.BlockSpec((1, tn), lambda i, j: (0, j)))
        operands.append(bp)

    item = h1.dtype.itemsize
    fp = 2 * (tm * r_in_p + r_out_p * r_in_p + tn * r_out_p) * item
    fp += 2 * tm * tn * item
    if has_bias:
        fp += 2 * tn * item
    fp += tm * r_out_p * 4

    grid = (Mp // tm, Np // tn)
    out = pl.pallas_call(
        functools.partial(_lowrank_tail_kernel, has_bias=has_bias),
        out_shape=jax.ShapeDtypeStruct((Mp, Np), h1.dtype),
        grid_spec=pltpu.PrefetchScalarGridSpec(
            num_scalar_prefetch=0,
            grid=grid,
            in_specs=in_specs,
            out_specs=pl.BlockSpec((tm, tn), lambda i, j: (i, j)),
            scratch_shapes=[pltpu.VMEM((tm, r_out_p), jnp.float32)],
        ),
        compiler_params=pltpu.CompilerParams(
            # N axis must stay "arbitrary": the hoisted intermediate is
            # recomputed at j == 0 of each row block and reused for all j.
            dimension_semantics=("parallel", "arbitrary"),
            vmem_limit_bytes=_vmem_limit(fp),
        ),
    )(*operands)

    if (Mp, Np) != (M, N):
        out = out[:M, :N]
    return out


# --------------------------------- public API ---------------------------------
def sparse_grad_linear(x, weight, bias=None, U=None, VT=None, is_sparse=False,
                       *, tm=256, tn=512, tk=1024):
    """Forward of SparseGradLinear.

    is_sparse=False: weight is dense (out_features, in_features)  ->  x @ W.T + b
    is_sparse=True : weight is the low-rank core (r_out, r_in),
                     U: (r_in, in_features), VT: (out_features, r_out)
                     -> ((x @ U.T) @ weight.T) @ VT.T + b
    """
    lead = x.shape[:-1]

    if not is_sparse:
        out_features, in_features = weight.shape
        x2d = x.reshape(-1, in_features)
        y = _matmul_nt(x2d, weight, bias, tm=tm, tn=tn, tk=tk)
    else:
        assert U is not None and VT is not None
        r_out, r_in = weight.shape
        assert U.shape[0] == r_in and VT.shape[1] == r_out, (
            "is_sparse=True expects the low-rank core weight (r_out, r_in) with "
            "U: (r_in, in_features), VT: (out_features, r_out)")
        in_features = U.shape[1]
        out_features = VT.shape[0]
        x2d = x.reshape(-1, in_features)

        # (1) h = x @ U.T  — standard tiled matmul, no bias stream.
        h1 = _matmul_nt(x2d, U, None, tm=tm, tn=tn, tk=tk)

        # (2)+(3) fused when the resident core + tiles fit the per-generation
        # VMEM budget (64 MiB/TC on v7x vs 128 MiB on v5e/v6e); otherwise fall
        # back to two standard tiled matmuls.
        budget = max(24 << 20, (_vmem_capacity_bytes() * 5) // 8)
        fp = _tail_fused_footprint(x2d.shape[0], out_features, r_in, r_out,
                                   x2d.dtype.itemsize)
        if fp <= budget:
            y = _lowrank_tail_fused(h1, weight, VT, bias)
        else:
            h2 = _matmul_nt(h1, weight, None, tm=tm, tn=tn, tk=tk)
            y = _matmul_nt(h2, VT, bias, tm=tm, tn=tn, tk=tk)

    return y.reshape(lead + (out_features,))


if __name__ == "__main__":
    # Small deterministic setup consistent with the module:
    # x: (batch=2, seq=8, in_features=256), weight: (out=128, in=256), bias: (128,)
    batch, seq = 2, 8
    in_features, out_features = 256, 128
    r_in, r_out = 48, 40   # low ranks (non-multiples of 128 to exercise padding)

    key = jax.random.PRNGKey(0)
    kx, kw, kb, ku, kv, kc = jax.random.split(key, 6)

    x = jax.random.normal(kx, (batch, seq, in_features), dtype=jnp.float32)
    bound = 1.0 / (in_features ** 0.5)
    weight = jax.random.uniform(kw, (out_features, in_features), jnp.float32,
                                minval=-bound, maxval=bound)
    bias = jax.random.uniform(kb, (out_features,), jnp.float32,
                              minval=-bound, maxval=bound)

    # ---- dense (default) path: y = x @ W.T + b ----
    y = sparse_grad_linear(x, weight, bias, is_sparse=False)
    y = jax.block_until_ready(y)
    y_ref = (x.reshape(-1, in_features) @ weight.T + bias).reshape(
        batch, seq, out_features)
    assert y.shape == (batch, seq, out_features)
    assert jnp.allclose(y, y_ref, atol=1e-4, rtol=1e-4)

    # ---- sparse path: weight is the low-rank core (r_out, r_in) ----
    U = jax.random.normal(ku, (r_in, in_features), dtype=jnp.float32) / (in_features ** 0.5)
    VT = jax.random.normal(kv, (out_features, r_out), dtype=jnp.float32) / (r_out ** 0.5)
    core = jax.random.normal(kc, (r_out, r_in), dtype=jnp.float32) / (r_in ** 0.5)

    ys = sparse_grad_linear(x, core, bias, U=U, VT=VT, is_sparse=True)
    ys = jax.block_until_ready(ys)
    ys_ref = (((x.reshape(-1, in_features) @ U.T) @ core.T) @ VT.T + bias).reshape(
        batch, seq, out_features)
    assert ys.shape == (batch, seq, out_features)
    assert jnp.allclose(ys, ys_ref, atol=1e-3, rtol=1e-3)

    # TODO(synk): backward grad-sparsification (Tucker decomposition / create_UV,
    # thresholding + to_sparse) is training machinery with no forward-pass Pallas
    # equivalent and is intentionally not implemented.
    print("KERNEL_OK")
</pallas_src>

<mosaic_0001>
module attributes {stable_mosaic.version = 11 : i64} {
  func.func @_matmul_nt_kernel(%arg0: i32, %arg1: i32, %arg2: i32, %arg3: memref<16x256xf32, #tpu.memory_space<vmem>>, %arg4: memref<128x256xf32, #tpu.memory_space<vmem>>, %arg5: memref<1x128xf32, #tpu.memory_space<vmem>>, %arg6: memref<16x128xf32, #tpu.memory_space<vmem>>) attributes {dimension_semantics = [#tpu.dimension_semantics<parallel>, #tpu.dimension_semantics<parallel>, #tpu.dimension_semantics<arbitrary>], iteration_bounds = array<i64: 1, 1, 1>, scalar_prefetch = 0 : i64, scratch_operands = 0 : i64, tpu.core_type = #tpu.core_type<tc>, window_params = [{transform_indices = @transform_0, window_bounds = array<i64: 16, 256>}, {transform_indices = @transform_1, window_bounds = array<i64: 128, 256>}, {transform_indices = @transform_2, window_bounds = array<i64: 1, 128>}, {transform_indices = @transform_3, window_bounds = array<i64: 16, 128>}]} {
    %c0_i32 = arith.constant 0 : i32
    %0 = arith.cmpi eq, %arg2, %c0_i32 : i32
    %1 = arith.extui %0 : i1 to i32
    %c0_i32_0 = arith.constant 0 : i32
    %2 = arith.cmpi ne, %1, %c0_i32_0 : i32
    scf.if %2 {
      %cst_10 = arith.constant 0.000000e+00 : f32
      %12 = vector.broadcast %cst_10 : f32 to vector<16x128xf32>
      %c0_11 = arith.constant 0 : index
      %c0_12 = arith.constant 0 : index
      %13 = vector.load %arg6[%c0_11, %c0_12] : memref<16x128xf32, #tpu.memory_space<vmem>>, vector<16x128xf32>
      tpu.vector_store %arg6[%c0_11, %c0_12], %12 {strides = array<i32>} : memref<16x128xf32, #tpu.memory_space<vmem>>, vector<16x128xf32>,
    } else {
    }
    %c0 = arith.constant 0 : index
    %c0_1 = arith.constant 0 : index
    %3 = vector.load %arg6[%c0, %c0_1] : memref<16x128xf32, #tpu.memory_space<vmem>>, vector<16x128xf32>
    %c0_2 = arith.constant 0 : index
    %c0_3 = arith.constant 0 : index
    %4 = vector.load %arg3[%c0_2, %c0_3] : memref<16x256xf32, #tpu.memory_space<vmem>>, vector<16x256xf32>
    %c0_4 = arith.constant 0 : index
    %c0_5 = arith.constant 0 : index
    %5 = vector.load %arg4[%c0_4, %c0_5] : memref<128x256xf32, #tpu.memory_space<vmem>>, vector<128x256xf32>
    %cst = arith.constant dense<0.000000e+00> : vector<16x128xf32>
    %6 = tpu.matmul %4, %5, %cst {dimension_numbers = #tpu.dot_dimension_numbers<[1], [1], [0], [0], [0, 0, 1, 0], [], []>} : vector<16x256xf32>, vector<128x256xf32>, vector<16x128xf32> -> vector<16x128xf32>
    %7 = arith.addf %3, %6 : vector<16x128xf32>
    %c0_6 = arith.constant 0 : index
    %c0_7 = arith.constant 0 : index
    %8 = vector.load %arg6[%c0_6, %c0_7] : memref<16x128xf32, #tpu.memory_space<vmem>>, vector<16x128xf32>
    tpu.vector_store %arg6[%c0_6, %c0_7], %7 {strides = array<i32>} : memref<16x128xf32, #tpu.memory_space<vmem>>, vector<16x128xf32>,
    %c0_i32_8 = arith.constant 0 : i32
    %9 = arith.cmpi eq, %arg2, %c0_i32_8 : i32
    %10 = arith.extui %9 : i1 to i32
    %c0_i32_9 = arith.constant 0 : i32
    %11 = arith.cmpi ne, %10, %c0_i32_9 : i32
    scf.if %11 {
      %c0_10 = arith.constant 0 : index
      %c0_11 = arith.constant 0 : index
      %12 = vector.load %arg6[%c0_10, %c0_11] : memref<16x128xf32, #tpu.memory_space<vmem>>, vector<16x128xf32>
      %c0_12 = arith.constant 0 : index
      %c0_13 = arith.constant 0 : index
      %13 = vector.load %arg5[%c0_12, %c0_13] : memref<1x128xf32, #tpu.memory_space<vmem>>, vector<1x128xf32>
      %14 = vector.broadcast %13 : vector<1x128xf32> to vector<16x128xf32>
      %15 = arith.addf %12, %14 : vector<16x128xf32>
      %c0_14 = arith.constant 0 : index
      %c0_15 = arith.constant 0 : index
      %16 = vector.load %arg6[%c0_14, %c0_15] : memref<16x128xf32, #tpu.memory_space<vmem>>, vector<16x128xf32>
      tpu.vector_store %arg6[%c0_14, %c0_15], %15 {strides = array<i32>} : memref<16x128xf32, #tpu.memory_space<vmem>>, vector<16x128xf32>,
    } else {
    }
    return
  }
  func.func @transform_0(%arg0: i32, %arg1: i32, %arg2: i32) -> (i32, i32) {
    %c0_i32 = arith.constant 0 : i32
    return %arg0, %arg2 : i32, i32
  }
  func.func @transform_1(%arg0: i32, %arg1: i32, %arg2: i32) -> (i32, i32) {
    %c0_i32 = arith.constant 0 : i32
    return %arg1, %arg2 : i32, i32
  }
  func.func @transform_2(%arg0: i32, %arg1: i32, %arg2: i32) -> (i32, i32) {
    %c0_i32 = arith.constant 0 : i32
    %c0_i32_0 = arith.constant 0 : i32
    return %c0_i32, %arg1 : i32, i32
  }
  func.func @transform_3(%arg0: i32, %arg1: i32, %arg2: i32) -> (i32, i32) {
    %c0_i32 = arith.constant 0 : i32
    return %arg0, %arg1 : i32, i32
  }
}

</mosaic_0001>

<llo_original>
// kernel: tpu_custom_call.1
$region0: #{tpu_custom_call.1}
  #allocation0 [shape = 'u32[]', space=smem, size = 0x4, offset = 0x4, fixed_abs, tag = 'smem constant byte address 0x4 - core index']
  #allocation1 [shape = 'u32[72,128]{1,0:T(1,128)}', space=vmem, size = 0x9000, scoped, tag = 'internal scratch']
  %s0 = inlined_call_operand.hbm [shape: f32[16,256], index: 0, kind: input, shape index: {}]
  %s1 = inlined_call_operand.hbm [shape: f32[128,256], index: 1, kind: input, shape index: {}]
  %s2 = inlined_call_operand.vmem [shape: f32[1,128], index: 2, kind: input, shape index: {}]
  %s3 = inlined_call_operand.hbm [shape: f32[16,128], index: 3, kind: output, shape index: {}]
  %s4 = sld [smem:[#allocation0]]
  $region38: #{tpu_custom_call.1} parent=0
    _
  %s6 = ssub.s32 1, %s4
  %s7 = scalar_select 0, %s6, %s4
  $region1: #{tpu_custom_call.1} parent=0
    #allocation2 [shape = 'u8[16384]{0}', space=vmem, size = 0x4000, scoped, tag = 'input window, operand 0, single buffered']
    #allocation3 [shape = 's32[1]{0}', space=sflag, size = 0x4, scoped, tag = 'scoped memory for tpu_custom_call.1']
    #allocation4 [shape = 's32[1]{0}', space=sflag, size = 0x4, scoped, tag = 'scoped memory for tpu_custom_call.1']
    #allocation5 [shape = 'u8[131072]{0}', space=vmem, size = 0x20000, scoped, tag = 'input window, operand 1, single buffered']
    #allocation6 [shape = 's32[1]{0}', space=sflag, size = 0x4, scoped, tag = 'scoped memory for tpu_custom_call.1']
    #allocation7 [shape = 'u8[8192]{0}', space=vmem, size = 0x2000, scoped, tag = 'output window, operand 0, single buffered']
    %8 = vsyncpa [#allocation3], 0
    %9 = vsyncpa [#allocation6], 0
    %10 = vsyncpa [#allocation4], 0
    // Predicated region
    $region2: #{tpu_custom_call.1} parent=1 // pred_check
      _
    $region3: #{tpu_custom_call.1} parent=1 // pred_check_branch
      %12 = sbr.rel (0) target = $region5
    $region4: #{tpu_custom_call.1} parent=1 // pred_region
      %14 = vsyncadd [#allocation3], 0
      %s15 = sshll.u32 %s0, 4
      %s16 = int_to_ptr.hbm [resolvable:$true] %s15
      %s17 = sshll.u32 [#allocation2], 4
      %s18 = int_to_ptr.vmem [resolvable:$true] %s17
      %23 = dma.hbm_to_vmem [thread:$0]  %s16, 512, %s18, [#allocation3], 256, 256, 16
    $region5: #{tpu_custom_call.1} parent=1 // pred_fallthru
      _
    // Predicated region
    $region6: #{tpu_custom_call.1} parent=1 // pred_check
      _
    $region7: #{tpu_custom_call.1} parent=1 // pred_check_branch
      %25 = sbr.rel (0) target = $region9
    $region8: #{tpu_custom_call.1} parent=1 // pred_region
      %27 = vsyncadd [#allocation6], 0
      %s28 = sshll.u32 %s1, 4
      %s29 = int_to_ptr.hbm [resolvable:$true] %s28
      %s30 = sshll.u32 [#allocation5], 4
      %s31 = int_to_ptr.vmem [resolvable:$true] %s30
      %36 = dma.hbm_to_vmem [thread:$0]  %s29, 4096, %s31, [#allocation6], 256, 256, 16
    $region9: #{tpu_custom_call.1} parent=1 // pred_fallthru
      _
    // Predicated region
    $region10: #{tpu_custom_call.1} parent=1 // pred_check
      _
    $region11: #{tpu_custom_call.1} parent=1 // pred_check_branch
      %38 = sbr.rel (0) target = $region13
    $region12: #{tpu_custom_call.1} parent=1 // pred_region
      _
    $region13: #{tpu_custom_call.1} parent=1 // pred_fallthru
      _
    // Predicated region
    $region14: #{tpu_custom_call.1} parent=1 // pred_check
      _
    $region15: #{tpu_custom_call.1} parent=1 // pred_check_branch
      %40 = sbr.rel (0) target = $region17
    $region16: #{tpu_custom_call.1} parent=1 // pred_region
      %42 = dma.done [#allocation3], 512
    $region17: #{tpu_custom_call.1} parent=1 // pred_fallthru
      _
    // Predicated region
    $region18: #{tpu_custom_call.1} parent=1 // pred_check
      _
    $region19: #{tpu_custom_call.1} parent=1 // pred_check_branch
      %44 = sbr.rel (0) target = $region21
    $region20: #{tpu_custom_call.1} parent=1 // pred_region
      %46 = dma.done [#allocation6], 4096
    $region21: #{tpu_custom_call.1} parent=1 // pred_fallthru
      _
    %p47 = scmp.eq.s32.totalorder 0, 0
    // Predicated region
    $region22: #{tpu_custom_call.1} parent=1 // pred_check
      %p48 = pneg %p47
    $region23: #{tpu_custom_call.1} parent=1 // pred_check_branch
      %50 = sbr.rel (%p48) target = $region25
    $region24: #{tpu_custom_call.1} parent=1 // pred_region
      %51 = vst [vmem:[#allocation7] sm:$0xff] 0.0
      %52 = vst [vmem:[#allocation7 + $0x8] sm:$0xff] 0.0
    $region25: #{tpu_custom_call.1} parent=1 // pred_fallthru
      _
    %v53 = vld [vmem:[#allocation7] sm:$0xff]
    %v54 = vld [vmem:[#allocation7 + $0x8] sm:$0xff]
    %v55 = vld [vmem:[#allocation2] sm:$0xff]
    %v56 = vld [vmem:[#allocation2 + $0x8] sm:$0xff]
    %v57 = vld [vmem:[#allocation2 + $0x10] sm:$0xff]
    %v58 = vld [vmem:[#allocation2 + $0x18] sm:$0xff]
    %v59 = vld [vmem:[#allocation5] sm:$0xff]
    %v60 = vld [vmem:[#allocation5 + $0x8] sm:$0xff]
    %v61 = vld [vmem:[#allocation5 + $0x10] sm:$0xff]
    %v62 = vld [vmem:[#allocation5 + $0x18] sm:$0xff]
    %v63 = vld [vmem:[#allocation5 + $0x20] sm:$0xff]
    %v64 = vld [vmem:[#allocation5 + $0x28] sm:$0xff]
    %v65 = vld [vmem:[#allocation5 + $0x30] sm:$0xff]
    %v66 = vld [vmem:[#allocation5 + $0x38] sm:$0xff]
    %v67 = vld [vmem:[#allocation5 + $0x40] sm:$0xff]
    %v68 = vld [vmem:[#allocation5 + $0x48] sm:$0xff]
    %v69 = vld [vmem:[#allocation5 + $0x50] sm:$0xff]
    %v70 = vld [vmem:[#allocation5 + $0x58] sm:$0xff]
    %v71 = vld [vmem:[#allocation5 + $0x60] sm:$0xff]
    %v72 = vld [vmem:[#allocation5 + $0x68] sm:$0xff]
    %v73 = vld [vmem:[#allocation5 + $0x70] sm:$0xff]
    %v74 = vld [vmem:[#allocation5 + $0x78] sm:$0xff]
    %v75 = vld [vmem:[#allocation5 + $0x80] sm:$0xff]
    %v76 = vld [vmem:[#allocation5 + $0x88] sm:$0xff]
    %v77 = vld [vmem:[#allocation5 + $0x90] sm:$0xff]
    %v78 = vld [vmem:[#allocation5 + $0x98] sm:$0xff]
    %v79 = vld [vmem:[#allocation5 + $0xa0] sm:$0xff]
    %v80 = vld [vmem:[#allocation5 + $0xa8] sm:$0xff]
    %v81 = vld [vmem:[#allocation5 + $0xb0] sm:$0xff]
    %v82 = vld [vmem:[#allocation5 + $0xb8] sm:$0xff]
    %v83 = vld [vmem:[#allocation5 + $0xc0] sm:$0xff]
    %v84 = vld [vmem:[#allocation5 + $0xc8] sm:$0xff]
    %v85 = vld [vmem:[#allocation5 + $0xd0] sm:$0xff]
    %v86 = vld [vmem:[#allocation5 + $0xd8] sm:$0xff]
    %v87 = vld [vmem:[#allocation5 + $0xe0] sm:$0xff]
    %v88 = vld [vmem:[#allocation5 + $0xe8] sm:$0xff]
    %v89 = vld [vmem:[#allocation5 + $0xf0] sm:$0xff]
    %v90 = vld [vmem:[#allocation5 + $0xf8] sm:$0xff]
    %91 = vmatpush.xpose.msra.mxu0 %v89
    %92 = vmatpush.xpose.msra.mxu0 %v87
    %93 = vmatpush.xpose.msra.mxu0 %v85
    %94 = vmatpush.xpose.msra.mxu0 %v83
    %95 = vmatpush.xpose.msra.mxu0 %v81
    %96 = vmatpush.xpose.msra.mxu0 %v79
    %97 = vmatpush.xpose.msra.mxu0 %v77
    %98 = vmatpush.xpose.msra.mxu0 %v75
    %99 = vmatpush.xpose.msra.mxu0 %v73
    %100 = vmatpush.xpose.msra.mxu0 %v71
    %101 = vmatpush.xpose.msra.mxu0 %v69
    %102 = vmatpush.xpose.msra.mxu0 %v67
    %103 = vmatpush.xpose.msra.mxu0 %v65
    %104 = vmatpush.xpose.msra.mxu0 %v63
    %105 = vmatpush.xpose.msra.mxu0 %v61
    %106 = vmatpush.xpose.msra.mxu0 %v59
    %107 = vmatmul.f32.gmra.mxu0 %v55
    %v108 = vpop.f32.mrf.mxu0
    %v109 = vadd.f32 0.0, %v108
    %110 = vmatmul.f32.gmra.mxu0 %v57
    %v111 = vpop.f32.mrf.mxu0
    %v112 = vadd.f32 0.0, %v111
    %113 = vdwg.mxu0
    %114 = vmatpush.xpose.msra.mxu0 %v90
    %115 = vmatpush.xpose.msra.mxu0 %v88
    %116 = vmatpush.xpose.msra.mxu0 %v86
    %117 = vmatpush.xpose.msra.mxu0 %v84
    %118 = vmatpush.xpose.msra.mxu0 %v82
    %119 = vmatpush.xpose.msra.mxu0 %v80
    %120 = vmatpush.xpose.msra.mxu0 %v78
    %121 = vmatpush.xpose.msra.mxu0 %v76
    %122 = vmatpush.xpose.msra.mxu0 %v74
    %123 = vmatpush.xpose.msra.mxu0 %v72
    %124 = vmatpush.xpose.msra.mxu0 %v70
    %125 = vmatpush.xpose.msra.mxu0 %v68
    %126 = vmatpush.xpose.msra.mxu0 %v66
    %127 = vmatpush.xpose.msra.mxu0 %v64
    %128 = vmatpush.xpose.msra.mxu0 %v62
    %129 = vmatpush.xpose.msra.mxu0 %v60
    %130 = vmatmul.f32.gmra.mxu0 %v56
    %v131 = vpop.f32.mrf.mxu0
    %v132 = vadd.f32 %v109, %v131
    %133 = vmatmul.f32.gmra.mxu0 %v58
    %v134 = vpop.f32.mrf.mxu0
    %v135 = vadd.f32 %v112, %v134
    %136 = vdwg.mxu0
    %v137 = vadd.f32 %v53, %v132
    %v138 = vadd.f32 %v54, %v135
    %139 = vst [vmem:[#allocation7] sm:$0xff] %v137
    %140 = vst [vmem:[#allocation7 + $0x8] sm:$0xff] %v138
    // Predicated region
    $region26: #{tpu_custom_call.1} parent=1 // pred_check
      %p141 = pneg %p47
    $region27: #{tpu_custom_call.1} parent=1 // pred_check_branch
      %143 = sbr.rel (%p141) target = $region29
    $region28: #{tpu_custom_call.1} parent=1 // pred_region
      %v144 = vld [vmem:[#allocation7] sm:$0xff]
      %v145 = vld [vmem:[#allocation7 + $0x8] sm:$0xff]
      %v146 = vld [vmem:[%s2] sm:$0x1]
      %v148 = vperm.slane %v146, 0
      %v150 = vadd.f32 %v144, %v148
      %v151 = vadd.f32 %v145, %v148
      %152 = vst [vmem:[#allocation7] sm:$0xff] %v150
      %153 = vst [vmem:[#allocation7 + $0x8] sm:$0xff] %v151
    $region29: #{tpu_custom_call.1} parent=1 // pred_fallthru
      _
    // Predicated region
    $region30: #{tpu_custom_call.1} parent=1 // pred_check
      _
    $region31: #{tpu_custom_call.1} parent=1 // pred_check_branch
      %155 = sbr.rel (0) target = $region33
    $region32: #{tpu_custom_call.1} parent=1 // pred_region
      %157 = vsyncadd [#allocation4], 0
      %s158 = sshll.u32 [#allocation7], 4
      %s159 = int_to_ptr.vmem [resolvable:$true] %s158
      %s160 = sshll.u32 %s3, 4
      %s161 = int_to_ptr.hbm [resolvable:$true] %s160
      %166 = dma.vmem_to_hbm [thread:$0]  %s159, 256, %s161, [#allocation4], 128, 128, 8
    $region33: #{tpu_custom_call.1} parent=1 // pred_fallthru
      _
    // Predicated region
    $region34: #{tpu_custom_call.1} parent=1 // pred_check
      _
    $region35: #{tpu_custom_call.1} parent=1 // pred_check_branch
      %168 = sbr.rel (0) target = $region37
    $region36: #{tpu_custom_call.1} parent=1 // pred_region
      %170 = dma.done [#allocation4], 256
    $region37: #{tpu_custom_call.1} parent=1 // pred_fallthru
      _
    %171 = vsyncpa [#allocation3], 1
    %172 = vsyncpa [#allocation6], 1
    %173 = vsyncpa [#allocation4], 1

</llo_original>
